<compile_context>
chip_gen: v7x
topology: tpu7x:2x2x1
jax: 0.10.0
libtpu: 0.0.40
codegen_flags: <defaults>
</compile_context>

<pallas_src>
import functools

import jax
import jax.numpy as jnp
from jax.experimental import pallas as pl
from jax.experimental.pallas import tpu as pltpu


# ---------------------------------------------------------------------------
# Kernel
# ---------------------------------------------------------------------------
def fmodel_kernel(s_ref, a_ref, w1s_ref, w1a_ref, w2_ref, w3_ref, w4_ref,
                  b1_ref, b2_ref, b3_ref, b4_ref, out_ref):
    """One batch tile of the fused MLP (bf16 MXU operands, f32 accumulation).

    s_ref  : (TB, state_dim)   streamed
    a_ref  : (TB, action_dim)  streamed
    w1s_ref: (state_dim, 128)  bf16, ws1 in cols 0:64, zeros elsewhere
    w1a_ref: (action_dim, 128) bf16, wa1 in cols 64:128, zeros elsewhere
    w2_ref : (128, 256)        bf16, blockdiag(ws2, wa2)
    w3_ref : (256, 64)         bf16, wp1 (unpadded)
    w4_ref : (64, state_dim)   bf16, wp2 (unpadded)
    b*_ref : (1, N)            f32 biases
    out_ref: (TB, state_dim)   f32
    """
    s = s_ref[...].astype(jnp.bfloat16)
    a = a_ref[...].astype(jnp.bfloat16)

    # layer 1 (both branches fused): [hs | ha] = relu(s @ w1s + a @ w1a + [bs1 | ba1])
    h1 = (jnp.dot(s, w1s_ref[...], preferred_element_type=jnp.float32)
          + jnp.dot(a, w1a_ref[...], preferred_element_type=jnp.float32)
          + b1_ref[...])
    h1 = jnp.maximum(h1, 0.0)

    # layer 2 (block-diagonal): feat = [fs | fa] = h1 @ blockdiag(ws2, wa2) + [bs2 | ba2]
    feat = jnp.dot(h1.astype(jnp.bfloat16), w2_ref[...],
                   preferred_element_type=jnp.float32) + b2_ref[...]

    # predictor layer 1: relu(feat @ wp1 + bp1)   -> (TB, 64) VMEM value
    hp = jnp.dot(feat.astype(jnp.bfloat16), w3_ref[...],
                 preferred_element_type=jnp.float32) + b3_ref[...]
    hp = jnp.maximum(hp, 0.0)

    # predictor layer 2: (TB, state_dim) f32 store (minimal writeback)
    out_ref[...] = (jnp.dot(hp.astype(jnp.bfloat16), w4_ref[...],
                            preferred_element_type=jnp.float32) + b4_ref[...])


# ---------------------------------------------------------------------------
# Wrapper
# ---------------------------------------------------------------------------
def _round_up(x, m):
    return ((x + m - 1) // m) * m


@functools.partial(jax.jit, static_argnames=("max_block_b",))
def fmodel_forward(state, action, packed, *, max_block_b=2048):
    """Runs the fused Pallas kernel. Returns (B, state_dim) f32."""
    B, state_dim = state.shape
    action_dim = action.shape[1]
    state = state.astype(jnp.float32)
    action = action.astype(jnp.float32)

    # Batch tiling: single full-dim tile for small B; otherwise >= 2 multiple-of-8
    # tiles (v7x megacore sharding + DMA/compute pipelining).  No input padding:
    # the ragged last tile is handled by Pallas (stores beyond B are masked).
    if B <= 256:
        block_b = B
    else:
        block_b = min(max_block_b, _round_up(pl.cdiv(B, 2), 8))
    grid = (pl.cdiv(B, block_b),)

    def streamed(feature_dim):
        return pl.BlockSpec((block_b, feature_dim), lambda i: (i, 0))

    def resident(arr):
        # Full-array block, constant index_map -> DMA'd once, VMEM-resident.
        return pl.BlockSpec(arr.shape, lambda i: (0, 0))

    w_names = ("w1s", "w1a", "w2", "w3", "w4", "b1", "b2", "b3", "b4")
    weights = [packed[n] for n in w_names]

    return pl.pallas_call(
        fmodel_kernel,
        out_shape=jax.ShapeDtypeStruct((B, state_dim), jnp.float32),
        grid=grid,
        in_specs=[streamed(state_dim), streamed(action_dim)]
                 + [resident(w) for w in weights],
        out_specs=pl.BlockSpec((block_b, state_dim), lambda i: (i, 0)),
        compiler_params=pltpu.CompilerParams(
            dimension_semantics=("parallel",),
        ),
    )(state, action, *weights)


# ---------------------------------------------------------------------------
# Parameters: raw (per-layer, PyTorch-like) + packed (fused slabs for the kernel)
# ---------------------------------------------------------------------------
def init_raw_params(key, state_dim, action_dim):
    """Deterministic synthetic parameters. Weights stored (in, out); biases 1-D."""
    def linear(key, fan_in, fan_out):
        kw, kb = jax.random.split(key)
        scale = 1.0 / jnp.sqrt(jnp.float32(fan_in))
        w = jax.random.uniform(kw, (fan_in, fan_out), jnp.float32, -scale, scale)
        b = jax.random.uniform(kb, (fan_out,), jnp.float32, -scale, scale)
        return w, b

    keys = jax.random.split(key, 6)
    ws1, bs1 = linear(keys[0], state_dim, 64)
    ws2, bs2 = linear(keys[1], 64, 128)
    wa1, ba1 = linear(keys[2], action_dim, 64)
    wa2, ba2 = linear(keys[3], 64, 128)
    wp1, bp1 = linear(keys[4], 256, 64)
    wp2, bp2 = linear(keys[5], 64, state_dim)
    return {
        "ws1": ws1, "bs1": bs1, "ws2": ws2, "bs2": bs2,
        "wa1": wa1, "ba1": ba1, "wa2": wa2, "ba2": ba2,
        "wp1": wp1, "bp1": bp1, "wp2": wp2, "bp2": bp2,
    }


def pack_params(raw, *, weight_dtype=jnp.bfloat16):
    """Host-side packing: branch fusion, bf16 weights, f32 (1,N) bias rows."""
    state_dim = raw["ws1"].shape[0]
    action_dim = raw["wa1"].shape[0]

    # Layer-1 branch weights padded to the fused 128-wide hidden:
    # state branch -> cols 0:64, action branch -> cols 64:128.
    w1s = jnp.zeros((state_dim, 128), jnp.float32).at[:, :64].set(raw["ws1"])
    w1a = jnp.zeros((action_dim, 128), jnp.float32).at[:, 64:].set(raw["wa1"])

    # Layer-2 block-diagonal fusion: [hs|ha] @ blockdiag(ws2, wa2) = [fs|fa].
    w2 = jnp.zeros((128, 256), jnp.float32)
    w2 = w2.at[:64, :128].set(raw["ws2"]).at[64:, 128:].set(raw["wa2"])

    w3 = raw["wp1"]          # (256, 64)        unpadded
    w4 = raw["wp2"]          # (64, state_dim)  unpadded

    cast = lambda w: w.astype(weight_dtype)
    row = lambda b: b[None, :].astype(jnp.float32)
    return {
        "w1s": cast(w1s), "w1a": cast(w1a), "w2": cast(w2),
        "w3": cast(w3), "w4": cast(w4),
        "b1": row(jnp.concatenate([raw["bs1"], raw["ba1"]])),
        "b2": row(jnp.concatenate([raw["bs2"], raw["ba2"]])),
        "b3": row(raw["bp1"]),
        "b4": row(raw["bp2"]),
    }


def fmodel_reference(state, action, raw):
    """Plain-JAX f32 reference matching PyTorch Fmodel.forward exactly."""
    hs = jnp.maximum(state @ raw["ws1"] + raw["bs1"], 0.0)
    fs = hs @ raw["ws2"] + raw["bs2"]
    ha = jnp.maximum(action @ raw["wa1"] + raw["ba1"], 0.0)
    fa = ha @ raw["wa2"] + raw["ba2"]
    feat = jnp.concatenate([fs, fa], axis=1)
    hp = jnp.maximum(feat @ raw["wp1"] + raw["bp1"], 0.0)
    return hp @ raw["wp2"] + raw["bp2"]


# ---------------------------------------------------------------------------
# Demo / self-test
# ---------------------------------------------------------------------------
if __name__ == "__main__":
    state_dim, action_dim = 12, 6

    key = jax.random.PRNGKey(0)
    k_params, k_state, k_action = jax.random.split(key, 3)

    raw = init_raw_params(k_params, state_dim, action_dim)
    packed = pack_params(raw)

    # --- small single-tile case ------------------------------------------------
    B = 8
    state = jax.random.normal(k_state, (B, state_dim), jnp.float32)
    action = jax.random.normal(k_action, (B, action_dim), jnp.float32)

    out = jax.block_until_ready(fmodel_forward(state, action, packed))
    ref = fmodel_reference(state, action, raw)
    assert out.shape == (B, state_dim), out.shape
    # bf16 MXU operands with f32 accumulation -> relaxed parity tolerance.
    assert jnp.allclose(out, ref, atol=5e-2, rtol=5e-2), "mismatch vs reference (B=8)"

    # --- multi-tile ragged case (>=2 grid steps, masked last tile) -------------
    B2 = 600
    state2 = jax.random.normal(jax.random.PRNGKey(1), (B2, state_dim), jnp.float32)
    action2 = jax.random.normal(jax.random.PRNGKey(2), (B2, action_dim), jnp.float32)

    out2 = jax.block_until_ready(fmodel_forward(state2, action2, packed))
    ref2 = fmodel_reference(state2, action2, raw)
    assert out2.shape == (B2, state_dim), out2.shape
    assert jnp.allclose(out2, ref2, atol=5e-2, rtol=5e-2), "mismatch vs reference (B=600)"

    print("KERNEL_OK")
</pallas_src>

<mosaic_0001>
module attributes {stable_mosaic.version = 11 : i64} {
  func.func @fmodel_kernel(%arg0: i32, %arg1: memref<8x12xf32, #tpu.memory_space<vmem>>, %arg2: memref<8x6xf32, #tpu.memory_space<vmem>>, %arg3: memref<12x128xbf16, #tpu.memory_space<vmem>>, %arg4: memref<6x128xbf16, #tpu.memory_space<vmem>>, %arg5: memref<128x256xbf16, #tpu.memory_space<vmem>>, %arg6: memref<256x64xbf16, #tpu.memory_space<vmem>>, %arg7: memref<64x12xbf16, #tpu.memory_space<vmem>>, %arg8: memref<1x128xf32, #tpu.memory_space<vmem>>, %arg9: memref<1x256xf32, #tpu.memory_space<vmem>>, %arg10: memref<1x64xf32, #tpu.memory_space<vmem>>, %arg11: memref<1x12xf32, #tpu.memory_space<vmem>>, %arg12: memref<8x12xf32, #tpu.memory_space<vmem>>) attributes {dimension_semantics = [#tpu.dimension_semantics<parallel>], iteration_bounds = array<i64: 1>, scalar_prefetch = 0 : i64, scratch_operands = 0 : i64, tpu.core_type = #tpu.core_type<tc>, window_params = [{transform_indices = @transform_0, window_bounds = array<i64: 8, 12>}, {transform_indices = @transform_1, window_bounds = array<i64: 8, 6>}, {pipeline_mode = #tpu.pipeline_mode<synchronous>, transform_indices = @transform_2, window_bounds = array<i64: 12, 128>}, {pipeline_mode = #tpu.pipeline_mode<synchronous>, transform_indices = @transform_3, window_bounds = array<i64: 6, 128>}, {pipeline_mode = #tpu.pipeline_mode<synchronous>, transform_indices = @transform_4, window_bounds = array<i64: 128, 256>}, {pipeline_mode = #tpu.pipeline_mode<synchronous>, transform_indices = @transform_5, window_bounds = array<i64: 256, 64>}, {pipeline_mode = #tpu.pipeline_mode<synchronous>, transform_indices = @transform_6, window_bounds = array<i64: 64, 12>}, {pipeline_mode = #tpu.pipeline_mode<synchronous>, transform_indices = @transform_7, window_bounds = array<i64: 1, 128>}, {pipeline_mode = #tpu.pipeline_mode<synchronous>, transform_indices = @transform_8, window_bounds = array<i64: 1, 256>}, {pipeline_mode = #tpu.pipeline_mode<synchronous>, transform_indices = @transform_9, window_bounds = array<i64: 1, 64>}, {pipeline_mode = #tpu.pipeline_mode<synchronous>, transform_indices = @transform_10, window_bounds = array<i64: 1, 12>}, {transform_indices = @transform_11, window_bounds = array<i64: 8, 12>}]} {
    %c0 = arith.constant 0 : index
    %c0_0 = arith.constant 0 : index
    %0 = vector.load %arg1[%c0, %c0_0] : memref<8x12xf32, #tpu.memory_space<vmem>>, vector<8x12xf32>
    %1 = arith.truncf %0 : vector<8x12xf32> to vector<8x12xbf16>
    %c0_1 = arith.constant 0 : index
    %c0_2 = arith.constant 0 : index
    %2 = vector.load %arg2[%c0_1, %c0_2] : memref<8x6xf32, #tpu.memory_space<vmem>>, vector<8x6xf32>
    %3 = arith.truncf %2 : vector<8x6xf32> to vector<8x6xbf16>
    %c0_3 = arith.constant 0 : index
    %c0_4 = arith.constant 0 : index
    %4 = vector.load %arg3[%c0_3, %c0_4] : memref<12x128xbf16, #tpu.memory_space<vmem>>, vector<12x128xbf16>
    %cst = arith.constant dense<0.000000e+00> : vector<8x128xf32>
    %5 = tpu.matmul %1, %4, %cst {dimension_numbers = #tpu.dot_dimension_numbers<[1], [0], [0], [1], [0, 0, 1, 1], [], []>} : vector<8x12xbf16>, vector<12x128xbf16>, vector<8x128xf32> -> vector<8x128xf32>
    %c0_5 = arith.constant 0 : index
    %c0_6 = arith.constant 0 : index
    %6 = vector.load %arg4[%c0_5, %c0_6] : memref<6x128xbf16, #tpu.memory_space<vmem>>, vector<6x128xbf16>
    %cst_7 = arith.constant dense<0.000000e+00> : vector<8x128xf32>
    %7 = tpu.matmul %3, %6, %cst_7 {dimension_numbers = #tpu.dot_dimension_numbers<[1], [0], [0], [1], [0, 0, 1, 1], [], []>} : vector<8x6xbf16>, vector<6x128xbf16>, vector<8x128xf32> -> vector<8x128xf32>
    %8 = arith.addf %5, %7 : vector<8x128xf32>
    %c0_8 = arith.constant 0 : index
    %c0_9 = arith.constant 0 : index
    %9 = vector.load %arg8[%c0_8, %c0_9] : memref<1x128xf32, #tpu.memory_space<vmem>>, vector<1x128xf32>
    %10 = vector.broadcast %9 : vector<1x128xf32> to vector<8x128xf32>
    %11 = arith.addf %8, %10 : vector<8x128xf32>
    %cst_10 = arith.constant 0.000000e+00 : f32
    %12 = vector.broadcast %cst_10 : f32 to vector<8x128xf32>
    %13 = arith.maximumf %11, %12 : vector<8x128xf32>
    %14 = arith.truncf %13 : vector<8x128xf32> to vector<8x128xbf16>
    %c0_11 = arith.constant 0 : index
    %c0_12 = arith.constant 0 : index
    %15 = vector.load %arg5[%c0_11, %c0_12] : memref<128x256xbf16, #tpu.memory_space<vmem>>, vector<128x256xbf16>
    %cst_13 = arith.constant dense<0.000000e+00> : vector<8x256xf32>
    %16 = tpu.matmul %14, %15, %cst_13 {dimension_numbers = #tpu.dot_dimension_numbers<[1], [0], [0], [1], [0, 0, 1, 1], [], []>} : vector<8x128xbf16>, vector<128x256xbf16>, vector<8x256xf32> -> vector<8x256xf32>
    %c0_14 = arith.constant 0 : index
    %c0_15 = arith.constant 0 : index
    %17 = vector.load %arg9[%c0_14, %c0_15] : memref<1x256xf32, #tpu.memory_space<vmem>>, vector<1x256xf32>
    %18 = vector.broadcast %17 : vector<1x256xf32> to vector<8x256xf32>
    %19 = arith.addf %16, %18 : vector<8x256xf32>
    %20 = arith.truncf %19 : vector<8x256xf32> to vector<8x256xbf16>
    %c0_16 = arith.constant 0 : index
    %c0_17 = arith.constant 0 : index
    %21 = vector.load %arg6[%c0_16, %c0_17] : memref<256x64xbf16, #tpu.memory_space<vmem>>, vector<256x64xbf16>
    %cst_18 = arith.constant dense<0.000000e+00> : vector<8x64xf32>
    %22 = tpu.matmul %20, %21, %cst_18 {dimension_numbers = #tpu.dot_dimension_numbers<[1], [0], [0], [1], [0, 0, 1, 1], [], []>} : vector<8x256xbf16>, vector<256x64xbf16>, vector<8x64xf32> -> vector<8x64xf32>
    %c0_19 = arith.constant 0 : index
    %c0_20 = arith.constant 0 : index
    %23 = vector.load %arg10[%c0_19, %c0_20] : memref<1x64xf32, #tpu.memory_space<vmem>>, vector<1x64xf32>
    %24 = vector.broadcast %23 : vector<1x64xf32> to vector<8x64xf32>
    %25 = arith.addf %22, %24 : vector<8x64xf32>
    %cst_21 = arith.constant 0.000000e+00 : f32
    %26 = vector.broadcast %cst_21 : f32 to vector<8x64xf32>
    %27 = arith.maximumf %25, %26 : vector<8x64xf32>
    %28 = arith.truncf %27 : vector<8x64xf32> to vector<8x64xbf16>
    %c0_22 = arith.constant 0 : index
    %c0_23 = arith.constant 0 : index
    %29 = vector.load %arg7[%c0_22, %c0_23] : memref<64x12xbf16, #tpu.memory_space<vmem>>, vector<64x12xbf16>
    %cst_24 = arith.constant dense<0.000000e+00> : vector<8x12xf32>
    %30 = tpu.matmul %28, %29, %cst_24 {dimension_numbers = #tpu.dot_dimension_numbers<[1], [0], [0], [1], [0, 0, 1, 1], [], []>} : vector<8x64xbf16>, vector<64x12xbf16>, vector<8x12xf32> -> vector<8x12xf32>
    %c0_25 = arith.constant 0 : index
    %c0_26 = arith.constant 0 : index
    %31 = vector.load %arg11[%c0_25, %c0_26] : memref<1x12xf32, #tpu.memory_space<vmem>>, vector<1x12xf32>
    %32 = vector.broadcast %31 : vector<1x12xf32> to vector<8x12xf32>
    %33 = arith.addf %30, %32 : vector<8x12xf32>
    %c0_27 = arith.constant 0 : index
    %c0_28 = arith.constant 0 : index
    %34 = vector.load %arg12[%c0_27, %c0_28] : memref<8x12xf32, #tpu.memory_space<vmem>>, vector<8x12xf32>
    tpu.vector_store %arg12[%c0_27, %c0_28], %33 {strides = array<i32>} : memref<8x12xf32, #tpu.memory_space<vmem>>, vector<8x12xf32>,
    return
  }
  func.func @transform_0(%arg0: i32) -> (i32, i32) {
    %c0_i32 = arith.constant 0 : i32
    %c0_i32_0 = arith.constant 0 : i32
    return %arg0, %c0_i32 : i32, i32
  }
  func.func @transform_1(%arg0: i32) -> (i32, i32) {
    %c0_i32 = arith.constant 0 : i32
    %c0_i32_0 = arith.constant 0 : i32
    return %arg0, %c0_i32 : i32, i32
  }
  func.func @transform_2(%arg0: i32) -> (i32, i32) {
    %c0_i32 = arith.constant 0 : i32
    %c0_i32_0 = arith.constant 0 : i32
    %c0_i32_1 = arith.constant 0 : i32
    return %c0_i32, %c0_i32_0 : i32, i32
  }
  func.func @transform_3(%arg0: i32) -> (i32, i32) {
    %c0_i32 = arith.constant 0 : i32
    %c0_i32_0 = arith.constant 0 : i32
    %c0_i32_1 = arith.constant 0 : i32
    return %c0_i32, %c0_i32_0 : i32, i32
  }
  func.func @transform_4(%arg0: i32) -> (i32, i32) {
    %c0_i32 = arith.constant 0 : i32
    %c0_i32_0 = arith.constant 0 : i32
    %c0_i32_1 = arith.constant 0 : i32
    return %c0_i32, %c0_i32_0 : i32, i32
  }
  func.func @transform_5(%arg0: i32) -> (i32, i32) {
    %c0_i32 = arith.constant 0 : i32
    %c0_i32_0 = arith.constant 0 : i32
    %c0_i32_1 = arith.constant 0 : i32
    return %c0_i32, %c0_i32_0 : i32, i32
  }
  func.func @transform_6(%arg0: i32) -> (i32, i32) {
    %c0_i32 = arith.constant 0 : i32
    %c0_i32_0 = arith.constant 0 : i32
    %c0_i32_1 = arith.constant 0 : i32
    return %c0_i32, %c0_i32_0 : i32, i32
  }
  func.func @transform_7(%arg0: i32) -> (i32, i32) {
    %c0_i32 = arith.constant 0 : i32
    %c0_i32_0 = arith.constant 0 : i32
    %c0_i32_1 = arith.constant 0 : i32
    return %c0_i32, %c0_i32_0 : i32, i32
  }
  func.func @transform_8(%arg0: i32) -> (i32, i32) {
    %c0_i32 = arith.constant 0 : i32
    %c0_i32_0 = arith.constant 0 : i32
    %c0_i32_1 = arith.constant 0 : i32
    return %c0_i32, %c0_i32_0 : i32, i32
  }
  func.func @transform_9(%arg0: i32) -> (i32, i32) {
    %c0_i32 = arith.constant 0 : i32
    %c0_i32_0 = arith.constant 0 : i32
    %c0_i32_1 = arith.constant 0 : i32
    return %c0_i32, %c0_i32_0 : i32, i32
  }
  func.func @transform_10(%arg0: i32) -> (i32, i32) {
    %c0_i32 = arith.constant 0 : i32
    %c0_i32_0 = arith.constant 0 : i32
    %c0_i32_1 = arith.constant 0 : i32
    return %c0_i32, %c0_i32_0 : i32, i32
  }
  func.func @transform_11(%arg0: i32) -> (i32, i32) {
    %c0_i32 = arith.constant 0 : i32
    %c0_i32_0 = arith.constant 0 : i32
    return %arg0, %c0_i32 : i32, i32
  }
}

</mosaic_0001>

<llo_original>
// kernel: fmodel_forward.1
$region0: #{fmodel_forward.1}
  #allocation0 [shape = 'u32[]', space=smem, size = 0x4, offset = 0x4, fixed_abs, tag = 'smem constant byte address 0x4 - core index']
  #allocation1 [shape = 'u32[144,128]{1,0:T(1,128)}', space=vmem, size = 0x12000, scoped, tag = 'internal scratch']
  %s0 = inlined_call_operand.vmem [shape: f32[8,12], index: 0, kind: input, shape index: {}]
  %s1 = inlined_call_operand.vmem [shape: f32[8,6], index: 1, kind: input, shape index: {}]
  %s2 = inlined_call_operand.vmem [shape: bf16[12,128], index: 2, kind: input, shape index: {}]
  %s3 = inlined_call_operand.vmem [shape: bf16[6,128], index: 3, kind: input, shape index: {}]
  %s4 = inlined_call_operand.vmem [shape: bf16[128,256], index: 4, kind: input, shape index: {}]
  %s5 = inlined_call_operand.vmem [shape: bf16[256,64], index: 5, kind: input, shape index: {}]
  %s6 = inlined_call_operand.vmem [shape: bf16[64,12], index: 6, kind: input, shape index: {}]
  %s7 = inlined_call_operand.vmem [shape: f32[1,128], index: 7, kind: input, shape index: {}]
  %s8 = inlined_call_operand.vmem [shape: f32[1,256], index: 8, kind: input, shape index: {}]
  %s9 = inlined_call_operand.vmem [shape: f32[1,64], index: 9, kind: input, shape index: {}]
  %s10 = inlined_call_operand.vmem [shape: f32[1,12], index: 10, kind: input, shape index: {}]
  %s11 = inlined_call_operand.hbm [shape: f32[8,12], index: 11, kind: output, shape index: {}]
  %s12 = sld [smem:[#allocation0]]
  $region54: #{fmodel_forward.1} parent=0
    _
  %s14 = ssub.s32 1, %s12
  %s15 = scalar_select 0, %s14, %s12
  $region1: #{fmodel_forward.1} parent=0
    #allocation2 [shape = 'u8[4096]{0}', space=vmem, size = 0x1000, scoped, tag = 'output window, operand 0, single buffered']
    #allocation3 [shape = 's32[1]{0}', space=sflag, size = 0x4, scoped, tag = 'scoped memory for fmodel_forward.1']
    %16 = vsyncpa [#allocation3], 0
    // Predicated region
    $region2: #{fmodel_forward.1} parent=1 // pred_check
      _
    $region3: #{fmodel_forward.1} parent=1 // pred_check_branch
      %18 = sbr.rel (0) target = $region5
    $region4: #{fmodel_forward.1} parent=1 // pred_region
      _
    $region5: #{fmodel_forward.1} parent=1 // pred_fallthru
      _
    // Predicated region
    $region6: #{fmodel_forward.1} parent=1 // pred_check
      _
    $region7: #{fmodel_forward.1} parent=1 // pred_check_branch
      %20 = sbr.rel (0) target = $region9
    $region8: #{fmodel_forward.1} parent=1 // pred_region
      _
    $region9: #{fmodel_forward.1} parent=1 // pred_fallthru
      _
    // Predicated region
    $region10: #{fmodel_forward.1} parent=1 // pred_check
      _
    $region11: #{fmodel_forward.1} parent=1 // pred_check_branch
      %22 = sbr.rel (0) target = $region13
    $region12: #{fmodel_forward.1} parent=1 // pred_region
      _
    $region13: #{fmodel_forward.1} parent=1 // pred_fallthru
      _
    // Predicated region
    $region14: #{fmodel_forward.1} parent=1 // pred_check
      _
    $region15: #{fmodel_forward.1} parent=1 // pred_check_branch
      %24 = sbr.rel (0) target = $region17
    $region16: #{fmodel_forward.1} parent=1 // pred_region
      _
    $region17: #{fmodel_forward.1} parent=1 // pred_fallthru
      _
    // Predicated region
    $region18: #{fmodel_forward.1} parent=1 // pred_check
      _
    $region19: #{fmodel_forward.1} parent=1 // pred_check_branch
      %26 = sbr.rel (0) target = $region21
    $region20: #{fmodel_forward.1} parent=1 // pred_region
      _
    $region21: #{fmodel_forward.1} parent=1 // pred_fallthru
      _
    // Predicated region
    $region22: #{fmodel_forward.1} parent=1 // pred_check
      _
    $region23: #{fmodel_forward.1} parent=1 // pred_check_branch
      %28 = sbr.rel (0) target = $region25
    $region24: #{fmodel_forward.1} parent=1 // pred_region
      _
    $region25: #{fmodel_forward.1} parent=1 // pred_fallthru
      _
    // Predicated region
    $region26: #{fmodel_forward.1} parent=1 // pred_check
      _
    $region27: #{fmodel_forward.1} parent=1 // pred_check_branch
      %30 = sbr.rel (0) target = $region29
    $region28: #{fmodel_forward.1} parent=1 // pred_region
      _
    $region29: #{fmodel_forward.1} parent=1 // pred_fallthru
      _
    // Predicated region
    $region30: #{fmodel_forward.1} parent=1 // pred_check
      _
    $region31: #{fmodel_forward.1} parent=1 // pred_check_branch
      %32 = sbr.rel (0) target = $region33
    $region32: #{fmodel_forward.1} parent=1 // pred_region
      _
    $region33: #{fmodel_forward.1} parent=1 // pred_fallthru
      _
    // Predicated region
    $region34: #{fmodel_forward.1} parent=1 // pred_check
      _
    $region35: #{fmodel_forward.1} parent=1 // pred_check_branch
      %34 = sbr.rel (0) target = $region37
    $region36: #{fmodel_forward.1} parent=1 // pred_region
      _
    $region37: #{fmodel_forward.1} parent=1 // pred_fallthru
      _
    // Predicated region
    $region38: #{fmodel_forward.1} parent=1 // pred_check
      _
    $region39: #{fmodel_forward.1} parent=1 // pred_check_branch
      %36 = sbr.rel (0) target = $region41
    $region40: #{fmodel_forward.1} parent=1 // pred_region
      _
    $region41: #{fmodel_forward.1} parent=1 // pred_fallthru
      _
    // Predicated region
    $region42: #{fmodel_forward.1} parent=1 // pred_check
      _
    $region43: #{fmodel_forward.1} parent=1 // pred_check_branch
      %38 = sbr.rel (0) target = $region45
    $region44: #{fmodel_forward.1} parent=1 // pred_region
      _
    $region45: #{fmodel_forward.1} parent=1 // pred_fallthru
      _
    %v40 = vld [vmem:[%s0] sm:$0xff]
    %v41 = vpack.c.bf16 %v40, %v40
    %v42 = vld [vmem:[%s1] sm:$0xff]
    %v43 = vpack.c.bf16 %v42, %v42
    %v44 = vld [vmem:[%s2] sm:$0xf]
    %v45 = vld [vmem:[%s2 + $0x4] sm:$0x3]
    %v46 = vld [vmem:[%s3] sm:$0x7]
    %vm47 = vcmask 48128
    %v49 = vsel %vm47, %v43, 0
    %vm51 = vcmask 1042432
    %v53 = vsel %vm51, %v46, 0
    %55 = vmatprep.subr.bf16.mxu0 0
    %56 = vmatpush1.bf16.msra.mxu0 %v53
    %57 = vmatprep.subr.bf16.mxu0 0
    %58 = vmatpush1.bf16.msra.mxu0 0
    %59 = vmatprep.subr.bf16.mxu0 0
    %60 = vmatpush1.bf16.msra.mxu0 0
    %61 = vmatprep.subr.bf16.mxu0 0
    %62 = vmatpush1.bf16.msra.mxu0 0
    %63 = vmatprep.subr.bf16.mxu0 0
    %64 = vmatpush1.bf16.msra.mxu0 0
    %65 = vmatprep.subr.bf16.mxu0 0
    %66 = vmatpush1.bf16.msra.mxu0 0
    %67 = vmatprep.subr.bf16.mxu0 0
    %68 = vmatpush1.bf16.msra.mxu0 0
    %69 = vmatprep.subr.bf16.mxu0 0
    %70 = vmatpush1.bf16.msra.mxu0 0
    %71 = vmatprep.subr.bf16.mxu0 0
    %72 = vmatpush1.bf16.msra.mxu0 0
    %73 = vmatprep.subr.bf16.mxu0 0
    %74 = vmatpush1.bf16.msra.mxu0 0
    %75 = vmatprep.subr.bf16.mxu0 0
    %76 = vmatpush1.bf16.msra.mxu0 0
    %77 = vmatprep.subr.bf16.mxu0 0
    %78 = vmatpush1.bf16.msra.mxu0 0
    %79 = vmatprep.subr.bf16.mxu0 0
    %80 = vmatpush1.bf16.msra.mxu0 0
    %81 = vmatprep.subr.bf16.mxu0 0
    %82 = vmatpush1.bf16.msra.mxu0 0
    %83 = vmatprep.subr.bf16.mxu0 0
    %84 = vmatpush1.bf16.msra.mxu0 0
    %85 = vmatprep.subr.bf16.mxu0 0
    %86 = vmatpush1.bf16.msra.mxu0 0
    %87 = vmatprep.mubr.bf16.mxu0 0
    %88 = vmatmul.mubr.bf16.gmra.mrb[0].mxu0 %v49
    %v89 = vpop.f32.mrb[0].mxu0
    %v90 = vadd.f32 0.0, %v89
    %v91 = vpop.f32.mrb[0].mxu0
    %v92 = vpop.f32.mrb[0].mxu0
    %v93 = vpop.f32.mrb[0].mxu0
    %94 = vdwg.mxu0
    %v97 = vunpack.c.l.b16 %v44
    %v98 = vunpack.c.l.b16 %v45
    %v99 = vpack.c.b16 %v98, %v97
    %vm100 = vcmask 97280
    %v102 = vsel %vm100, %v41, 0
    %vm104 = vcmask 1045504
    %v106 = vsel %vm104, %v99, 0
    %108 = vmatprep.subr.bf16.mxu0 0
    %109 = vmatpush1.bf16.msra.mxu0 %v106
    %110 = vmatprep.subr.bf16.mxu0 0
    %111 = vmatpush1.bf16.msra.mxu0 0
    %112 = vmatprep.subr.bf16.mxu0 0
    %113 = vmatpush1.bf16.msra.mxu0 0
    %114 = vmatprep.subr.bf16.mxu0 0
    %115 = vmatpush1.bf16.msra.mxu0 0
    %116 = vmatprep.subr.bf16.mxu0 0
    %117 = vmatpush1.bf16.msra.mxu0 0
    %118 = vmatprep.subr.bf16.mxu0 0
    %119 = vmatpush1.bf16.msra.mxu0 0
    %120 = vmatprep.subr.bf16.mxu0 0
    %121 = vmatpush1.bf16.msra.mxu0 0
    %122 = vmatprep.subr.bf16.mxu0 0
    %123 = vmatpush1.bf16.msra.mxu0 0
    %124 = vmatprep.subr.bf16.mxu0 0
    %125 = vmatpush1.bf16.msra.mxu0 0
    %126 = vmatprep.subr.bf16.mxu0 0
    %127 = vmatpush1.bf16.msra.mxu0 0
    %128 = vmatprep.subr.bf16.mxu0 0
    %129 = vmatpush1.bf16.msra.mxu0 0
    %130 = vmatprep.subr.bf16.mxu0 0
    %131 = vmatpush1.bf16.msra.mxu0 0
    %132 = vmatprep.subr.bf16.mxu0 0
    %133 = vmatpush1.bf16.msra.mxu0 0
    %134 = vmatprep.subr.bf16.mxu0 0
    %135 = vmatpush1.bf16.msra.mxu0 0
    %136 = vmatprep.subr.bf16.mxu0 0
    %137 = vmatpush1.bf16.msra.mxu0 0
    %138 = vmatprep.subr.bf16.mxu0 0
    %139 = vmatpush1.bf16.msra.mxu0 0
    %140 = vmatprep.mubr.bf16.mxu0 0
    %141 = vmatmul.mubr.bf16.gmra.mrb[0].mxu0 %v102
    %v142 = vpop.f32.mrb[0].mxu0
    %v143 = vadd.f32 %v90, %v142
    %v144 = vpop.f32.mrb[0].mxu0
    %v145 = vpop.f32.mrb[0].mxu0
    %v146 = vpop.f32.mrb[0].mxu0
    %147 = vdwg.mxu0
    %v148 = vld [vmem:[%s7] sm:$0x1]
    %v150 = vlaneseq
    %v151 = vshrl.u32 %v150, 7
    %v152 = vsub.s32 0, %v151
    %v153 = vrot.slane %v148, %v152
    %v155 = vadd.f32 %v143, %v153
    %v156 = vmax.f32 %v155, 0.0
    %v157 = vpack.c.bf16 %v156, %v156
    %v158 = vld [vmem:[%s4] sm:$0xff]
    %v159 = vld [vmem:[%s4 + $0x8] sm:$0xff]
    %v160 = vld [vmem:[%s4 + $0x10] sm:$0xff]
    %v161 = vld [vmem:[%s4 + $0x18] sm:$0xff]
    %v162 = vld [vmem:[%s4 + $0x20] sm:$0xff]
    %v163 = vld [vmem:[%s4 + $0x28] sm:$0xff]
    %v164 = vld [vmem:[%s4 + $0x30] sm:$0xff]
    %v165 = vld [vmem:[%s4 + $0x38] sm:$0xff]
    %v166 = vld [vmem:[%s4 + $0x40] sm:$0xff]
    %v167 = vld [vmem:[%s4 + $0x48] sm:$0xff]
    %v168 = vld [vmem:[%s4 + $0x50] sm:$0xff]
    %v169 = vld [vmem:[%s4 + $0x58] sm:$0xff]
    %v170 = vld [vmem:[%s4 + $0x60] sm:$0xff]
    %v171 = vld [vmem:[%s4 + $0x68] sm:$0xff]
    %v172 = vld [vmem:[%s4 + $0x70] sm:$0xff]
    %v173 = vld [vmem:[%s4 + $0x78] sm:$0xff]
    %v174 = vld [vmem:[%s8] sm:$0x3]
    %v176 = vlaneseq
    %v177 = vshrl.u32 %v176, 7
    %v178 = vsub.s32 0, %v177
    %v179 = vrot.slane %v174, %v178
    %v180 = vlaneseq
    %v181 = vshrl.u32 %v180, 7
    %v182 = vsub.s32 1, %v181
    %v183 = vrot.slane %v174, %v182
    %v202 = vunpack.c.l.b16 %v158
    %v203 = vunpack.c.h.b16 %v158
    %v204 = vunpack.c.l.b16 %v159
    %v205 = vunpack.c.h.b16 %v159
    %v206 = vunpack.c.l.b16 %v160
    %v207 = vunpack.c.h.b16 %v160
    %v208 = vunpack.c.l.b16 %v161
    %v209 = vunpack.c.h.b16 %v161
    %v210 = vunpack.c.l.b16 %v162
    %v211 = vunpack.c.h.b16 %v162
    %v212 = vunpack.c.l.b16 %v163
    %v213 = vunpack.c.h.b16 %v163
    %v214 = vunpack.c.l.b16 %v164
    %v215 = vunpack.c.h.b16 %v164
    %v216 = vunpack.c.l.b16 %v165
    %v217 = vunpack.c.h.b16 %v165
    %v218 = vunpack.c.l.b16 %v166
    %v219 = vunpack.c.h.b16 %v166
    %v220 = vunpack.c.l.b16 %v167
    %v221 = vunpack.c.h.b16 %v167
    %v222 = vunpack.c.l.b16 %v168
    %v223 = vunpack.c.h.b16 %v168
    %v224 = vunpack.c.l.b16 %v169
    %v225 = vunpack.c.h.b16 %v169
    %v226 = vunpack.c.l.b16 %v170
    %v227 = vunpack.c.h.b16 %v170
    %v228 = vunpack.c.l.b16 %v171
    %v229 = vunpack.c.h.b16 %v171
    %v230 = vunpack.c.l.b16 %v172
    %v231 = vunpack.c.h.b16 %v172
    %v232 = vunpack.c.l.b16 %v173
    %v233 = vunpack.c.h.b16 %v173
    %v234 = vpack.c.b16 %v204, %v202
    %v235 = vpack.c.b16 %v205, %v203
    %v236 = vpack.c.b16 %v208, %v206
    %v237 = vpack.c.b16 %v209, %v207
    %v238 = vpack.c.b16 %v212, %v210
    %v239 = vpack.c.b16 %v213, %v211
    %v240 = vpack.c.b16 %v216, %v214
    %v241 = vpack.c.b16 %v217, %v215
    %v242 = vpack.c.b16 %v220, %v218
    %v243 = vpack.c.b16 %v221, %v219
    %v244 = vpack.c.b16 %v224, %v222
    %v245 = vpack.c.b16 %v225, %v223
    %v246 = vpack.c.b16 %v228, %v226
    %v247 = vpack.c.b16 %v229, %v227
    %v248 = vpack.c.b16 %v232, %v230
    %v249 = vpack.c.b16 %v233, %v231
    %266 = vmatprep.subr.bf16.mxu0 %v235
    %267 = vmatpush1.bf16.msra.mxu0 %v234
    %268 = vmatprep.subr.bf16.mxu0 %v237
    %269 = vmatpush1.bf16.msra.mxu0 %v236
    %270 = vmatprep.subr.bf16.mxu0 %v239
    %271 = vmatpush1.bf16.msra.mxu0 %v238
    %272 = vmatprep.subr.bf16.mxu0 %v241
    %273 = vmatpush1.bf16.msra.mxu0 %v240
    %274 = vmatprep.subr.bf16.mxu0 %v243
    %275 = vmatpush1.bf16.msra.mxu0 %v242
    %276 = vmatprep.subr.bf16.mxu0 %v245
    %277 = vmatpush1.bf16.msra.mxu0 %v244
    %278 = vmatprep.subr.bf16.mxu0 %v247
    %279 = vmatpush1.bf16.msra.mxu0 %v246
    %280 = vmatprep.subr.bf16.mxu0 %v249
    %281 = vmatpush1.bf16.msra.mxu0 %v248
    %282 = vmatprep.subr.bf16.mxu0 0
    %283 = vmatpush1.bf16.msra.mxu0 0
    %284 = vmatprep.subr.bf16.mxu0 0
    %285 = vmatpush1.bf16.msra.mxu0 0
    %286 = vmatprep.subr.bf16.mxu0 0
    %287 = vmatpush1.bf16.msra.mxu0 0
    %288 = vmatprep.subr.bf16.mxu0 0
    %289 = vmatpush1.bf16.msra.mxu0 0
    %290 = vmatprep.subr.bf16.mxu0 0
    %291 = vmatpush1.bf16.msra.mxu0 0
    %292 = vmatprep.subr.bf16.mxu0 0
    %293 = vmatpush1.bf16.msra.mxu0 0
    %294 = vmatprep.subr.bf16.mxu0 0
    %295 = vmatpush1.bf16.msra.mxu0 0
    %296 = vmatprep.subr.bf16.mxu0 0
    %297 = vmatpush1.bf16.msra.mxu0 0
    %298 = vmatprep.mubr.bf16.mxu0 0
    %299 = vmatmul.mubr.bf16.gmra.mrb[0].mxu0 %v157
    %v300 = vpop.f32.mrb[0].mxu0
    %v301 = vadd.f32 %v179, %v300
    %v302 = vpop.f32.mrb[0].mxu0
    %v303 = vadd.f32 %v183, %v302
    %v304 = vpop.f32.mrb[0].mxu0
    %v305 = vpop.f32.mrb[0].mxu0
    %306 = vdwg.mxu0
    %v307 = vpack.c.bf16 %v301, %v301
    %v308 = vpack.c.bf16 %v303, %v303
    %v309 = vld [vmem:[%s5] sm:$0xf]
    %v310 = vld [vmem:[%s5 + $0x4] sm:$0xf]
    %v311 = vld [vmem:[%s5 + $0x8] sm:$0xf]
    %v312 = vld [vmem:[%s5 + $0xc] sm:$0xf]
    %v313 = vld [vmem:[%s5 + $0x10] sm:$0xf]
    %v314 = vld [vmem:[%s5 + $0x14] sm:$0xf]
    %v315 = vld [vmem:[%s5 + $0x18] sm:$0xf]
    %v316 = vld [vmem:[%s5 + $0x1c] sm:$0xf]
    %v317 = vld [vmem:[%s5 + $0x20] sm:$0xf]
    %v318 = vld [vmem:[%s5 + $0x24] sm:$0xf]
    %v319 = vld [vmem:[%s5 + $0x28] sm:$0xf]
    %v320 = vld [vmem:[%s5 + $0x2c] sm:$0xf]
    %v321 = vld [vmem:[%s5 + $0x30] sm:$0xf]
    %v322 = vld [vmem:[%s5 + $0x34] sm:$0xf]
    %v323 = vld [vmem:[%s5 + $0x38] sm:$0xf]
    %v324 = vld [vmem:[%s5 + $0x3c] sm:$0xf]
    %v325 = vld [vmem:[%s5 + $0x40] sm:$0xf]
    %v326 = vld [vmem:[%s5 + $0x44] sm:$0xf]
    %v327 = vld [vmem:[%s5 + $0x48] sm:$0xf]
    %v328 = vld [vmem:[%s5 + $0x4c] sm:$0xf]
    %v329 = vld [vmem:[%s5 + $0x50] sm:$0xf]
    %v330 = vld [vmem:[%s5 + $0x54] sm:$0xf]
    %v331 = vld [vmem:[%s5 + $0x58] sm:$0xf]
    %v332 = vld [vmem:[%s5 + $0x5c] sm:$0xf]
    %v333 = vld [vmem:[%s5 + $0x60] sm:$0xf]
    %v334 = vld [vmem:[%s5 + $0x64] sm:$0xf]
    %v335 = vld [vmem:[%s5 + $0x68] sm:$0xf]
    %v336 = vld [vmem:[%s5 + $0x6c] sm:$0xf]
    %v337 = vld [vmem:[%s5 + $0x70] sm:$0xf]
    %v338 = vld [vmem:[%s5 + $0x74] sm:$0xf]
    %v339 = vld [vmem:[%s5 + $0x78] sm:$0xf]
    %v340 = vld [vmem:[%s5 + $0x7c] sm:$0xf]
    %v341 = vld [vmem:[%s9] sm:$0x1]
    %v343 = vlaneseq
    %v344 = vshrl.u32 %v343, 7
    %v345 = vsub.s32 0, %v344
    %v346 = vrot.slane %v341, %v345
    %v380 = vunpack.c.l.b16 %v309
    %v381 = vunpack.c.l.b16 %v310
    %v382 = vunpack.c.l.b16 %v311
    %v383 = vunpack.c.l.b16 %v312
    %v384 = vunpack.c.l.b16 %v313
    %v385 = vunpack.c.l.b16 %v314
    %v386 = vunpack.c.l.b16 %v315
    %v387 = vunpack.c.l.b16 %v316
    %v388 = vunpack.c.l.b16 %v317
    %v389 = vunpack.c.l.b16 %v318
    %v390 = vunpack.c.l.b16 %v319
    %v391 = vunpack.c.l.b16 %v320
    %v392 = vunpack.c.l.b16 %v321
    %v393 = vunpack.c.l.b16 %v322
    %v394 = vunpack.c.l.b16 %v323
    %v395 = vunpack.c.l.b16 %v324
    %v396 = vunpack.c.l.b16 %v325
    %v397 = vunpack.c.l.b16 %v326
    %v398 = vunpack.c.l.b16 %v327
    %v399 = vunpack.c.l.b16 %v328
    %v400 = vunpack.c.l.b16 %v329
    %v401 = vunpack.c.l.b16 %v330
    %v402 = vunpack.c.l.b16 %v331
    %v403 = vunpack.c.l.b16 %v332
    %v404 = vunpack.c.l.b16 %v333
    %v405 = vunpack.c.l.b16 %v334
    %v406 = vunpack.c.l.b16 %v335
    %v407 = vunpack.c.l.b16 %v336
    %v408 = vunpack.c.l.b16 %v337
    %v409 = vunpack.c.l.b16 %v338
    %v410 = vunpack.c.l.b16 %v339
    %v411 = vunpack.c.l.b16 %v340
    %v412 = vpack.c.b16 %v381, %v380
    %v413 = vpack.c.b16 %v383, %v382
    %v414 = vpack.c.b16 %v385, %v384
    %v415 = vpack.c.b16 %v387, %v386
    %v416 = vpack.c.b16 %v389, %v388
    %v417 = vpack.c.b16 %v391, %v390
    %v418 = vpack.c.b16 %v393, %v392
    %v419 = vpack.c.b16 %v395, %v394
    %v420 = vpack.c.b16 %v397, %v396
    %v421 = vpack.c.b16 %v399, %v398
    %v422 = vpack.c.b16 %v401, %v400
    %v423 = vpack.c.b16 %v403, %v402
    %v424 = vpack.c.b16 %v405, %v404
    %v425 = vpack.c.b16 %v407, %v406
    %v426 = vpack.c.b16 %v409, %v408
    %v427 = vpack.c.b16 %v411, %v410
    %444 = vmatprep.subr.bf16.mxu0 0
    %445 = vmatpush1.bf16.msra.mxu0 %v412
    %446 = vmatprep.subr.bf16.mxu0 0
    %447 = vmatpush1.bf16.msra.mxu0 %v413
    %448 = vmatprep.subr.bf16.mxu0 0
    %449 = vmatpush1.bf16.msra.mxu0 %v414
    %450 = vmatprep.subr.bf16.mxu0 0
    %451 = vmatpush1.bf16.msra.mxu0 %v415
    %452 = vmatprep.subr.bf16.mxu0 0
    %453 = vmatpush1.bf16.msra.mxu0 %v416
    %454 = vmatprep.subr.bf16.mxu0 0
    %455 = vmatpush1.bf16.msra.mxu0 %v417
    %456 = vmatprep.subr.bf16.mxu0 0
    %457 = vmatpush1.bf16.msra.mxu0 %v418
    %458 = vmatprep.subr.bf16.mxu0 0
    %459 = vmatpush1.bf16.msra.mxu0 %v419
    %460 = vmatprep.subr.bf16.mxu0 0
    %461 = vmatpush1.bf16.msra.mxu0 %v420
    %462 = vmatprep.subr.bf16.mxu0 0
    %463 = vmatpush1.bf16.msra.mxu0 %v421
    %464 = vmatprep.subr.bf16.mxu0 0
    %465 = vmatpush1.bf16.msra.mxu0 %v422
    %466 = vmatprep.subr.bf16.mxu0 0
    %467 = vmatpush1.bf16.msra.mxu0 %v423
    %468 = vmatprep.subr.bf16.mxu0 0
    %469 = vmatpush1.bf16.msra.mxu0 %v424
    %470 = vmatprep.subr.bf16.mxu0 0
    %471 = vmatpush1.bf16.msra.mxu0 %v425
    %472 = vmatprep.subr.bf16.mxu0 0
    %473 = vmatpush1.bf16.msra.mxu0 %v426
    %474 = vmatprep.subr.bf16.mxu0 0
    %475 = vmatpush1.bf16.msra.mxu0 %v427
    %476 = vmatprep.mubr.bf16.mxu0 %v308
    %477 = vmatmul.mubr.bf16.gmra.mrb[0].mxu0 %v307
    %v478 = vpop.f32.mrb[0].mxu0
    %v479 = vadd.f32 %v346, %v478
    %v480 = vpop.f32.mrb[0].mxu0
    %v481 = vpop.f32.mrb[0].mxu0
    %v482 = vpop.f32.mrb[0].mxu0
    %483 = vdwg.mxu0
    %v484 = vmax.f32 %v479, 0.0
    %v485 = vpack.c.bf16 %v484, %v484
    %v486 = vld [vmem:[%s6] sm:$0xf]
    %v487 = vld [vmem:[%s6 + $0x4] sm:$0xf]
    %v488 = vld [vmem:[%s6 + $0x8] sm:$0xf]
    %v489 = vld [vmem:[%s6 + $0xc] sm:$0xf]
    %v490 = vld [vmem:[%s6 + $0x10] sm:$0xf]
    %v491 = vld [vmem:[%s6 + $0x14] sm:$0xf]
    %v492 = vld [vmem:[%s6 + $0x18] sm:$0xf]
    %v493 = vld [vmem:[%s6 + $0x1c] sm:$0xf]
    %v494 = vld [vmem:[%s10] sm:$0x1]
    %v496 = vlaneseq
    %v497 = vshrl.u32 %v496, 7
    %v498 = vsub.s32 0, %v497
    %v499 = vrot.slane %v494, %v498
    %v509 = vunpack.c.l.b16 %v486
    %v510 = vunpack.c.l.b16 %v487
    %v511 = vunpack.c.l.b16 %v488
    %v512 = vunpack.c.l.b16 %v489
    %v513 = vunpack.c.l.b16 %v490
    %v514 = vunpack.c.l.b16 %v491
    %v515 = vunpack.c.l.b16 %v492
    %v516 = vunpack.c.l.b16 %v493
    %v517 = vpack.c.b16 %v510, %v509
    %v518 = vpack.c.b16 %v512, %v511
    %v519 = vpack.c.b16 %v514, %v513
    %v520 = vpack.c.b16 %v516, %v515
    %vm525 = vcmask 523264
    %v527 = vsel %vm525, %v485, 0
    %529 = vmatprep.subr.bf16.mxu0 0
    %530 = vmatpush1.bf16.msra.mxu0 %v517
    %531 = vmatprep.subr.bf16.mxu0 0
    %532 = vmatpush1.bf16.msra.mxu0 %v518
    %533 = vmatprep.subr.bf16.mxu0 0
    %534 = vmatpush1.bf16.msra.mxu0 %v519
    %535 = vmatprep.subr.bf16.mxu0 0
    %536 = vmatpush1.bf16.msra.mxu0 %v520
    %537 = vmatprep.subr.bf16.mxu0 0
    %538 = vmatpush1.bf16.msra.mxu0 0
    %539 = vmatprep.subr.bf16.mxu0 0
    %540 = vmatpush1.bf16.msra.mxu0 0
    %541 = vmatprep.subr.bf16.mxu0 0
    %542 = vmatpush1.bf16.msra.mxu0 0
    %543 = vmatprep.subr.bf16.mxu0 0
    %544 = vmatpush1.bf16.msra.mxu0 0
    %545 = vmatprep.subr.bf16.mxu0 0
    %546 = vmatpush1.bf16.msra.mxu0 0
    %547 = vmatprep.subr.bf16.mxu0 0
    %548 = vmatpush1.bf16.msra.mxu0 0
    %549 = vmatprep.subr.bf16.mxu0 0
    %550 = vmatpush1.bf16.msra.mxu0 0
    %551 = vmatprep.subr.bf16.mxu0 0
    %552 = vmatpush1.bf16.msra.mxu0 0
    %553 = vmatprep.subr.bf16.mxu0 0
    %554 = vmatpush1.bf16.msra.mxu0 0
    %555 = vmatprep.subr.bf16.mxu0 0
    %556 = vmatpush1.bf16.msra.mxu0 0
    %557 = vmatprep.subr.bf16.mxu0 0
    %558 = vmatpush1.bf16.msra.mxu0 0
    %559 = vmatprep.subr.bf16.mxu0 0
    %560 = vmatpush1.bf16.msra.mxu0 0
    %561 = vmatprep.mubr.bf16.mxu0 0
    %562 = vmatmul.mubr.bf16.gmra.mrb[0].mxu0 %v527
    %v563 = vpop.f32.mrb[0].mxu0
    %v564 = vadd.f32 %v499, %v563
    %v565 = vpop.f32.mrb[0].mxu0
    %v566 = vpop.f32.mrb[0].mxu0
    %v567 = vpop.f32.mrb[0].mxu0
    %568 = vdwg.mxu0
    %569 = vst.msk [vmem:[#allocation2] sm:$0xff] %vm100, %v564
    // Predicated region
    $region46: #{fmodel_forward.1} parent=1 // pred_check
      _
    $region47: #{fmodel_forward.1} parent=1 // pred_check_branch
      %571 = sbr.rel (0) target = $region49
    $region48: #{fmodel_forward.1} parent=1 // pred_region
      %s573 = ssub.s32 128, 128
      %574 = vsyncadd [#allocation3], %s573
      %s576 = sshll.u32 [#allocation2], 4
      %s577 = int_to_ptr.vmem [resolvable:$true] %s576
      %579 = dma.vmem_to_hbm [thread:$0]  %s577, 128, %s11, [#allocation3]
    $region49: #{fmodel_forward.1} parent=1 // pred_fallthru
      _
    // Predicated region
    $region50: #{fmodel_forward.1} parent=1 // pred_check
      _
    $region51: #{fmodel_forward.1} parent=1 // pred_check_branch
      %581 = sbr.rel (0) target = $region53
    $region52: #{fmodel_forward.1} parent=1 // pred_region
      %582 = dma.done [#allocation3], 128
    $region53: #{fmodel_forward.1} parent=1 // pred_fallthru
      _
    %583 = vsyncpa [#allocation3], 1

</llo_original>
